<compile_context>
chip_gen: v6e
topology: v6e:2x2x1
jax: 0.10.0
libtpu: 0.0.40
codegen_flags: <defaults>
</compile_context>

<pallas_src>
import functools
import math

import jax
import jax.numpy as jnp
from jax.experimental import pallas as pl
from jax.experimental.pallas import tpu as pltpu


# ----------------------------------------------------------------------------
# helpers
# ----------------------------------------------------------------------------
def _round_up(x, m):
    return (x + m - 1) // m * m


def _pick_tile(dim, candidates):
    for c in candidates:
        if dim % c == 0:
            return c
    return dim  # full extent (always a legal block: equals the array dim)


# ----------------------------------------------------------------------------
# Kernel 1: tiled linear  y = x @ Wt + b  (Wt already transposed to (K, N))
# ----------------------------------------------------------------------------
def _linear_kernel(x_ref, wt_ref, b_ref, o_ref, acc_ref):
    @pl.when(pl.program_id(2) == 0)
    def _init():
        acc_ref[...] = jnp.zeros_like(acc_ref)

    acc_ref[...] += jnp.dot(x_ref[...], wt_ref[...],
                            preferred_element_type=jnp.float32)

    @pl.when(pl.program_id(2) == pl.num_programs(2) - 1)
    def _finalize():
        o_ref[...] = (acc_ref[...] + b_ref[...]).astype(o_ref.dtype)


def linear(x, wt, b, *, compute_dtype=None, out_dtype=None):
    """x: (M, H_in), wt: (H_in, H_out), b: (H_out,) -> (M, H_out) [out_dtype]."""
    M, H_in = x.shape
    H_out = wt.shape[1]

    if compute_dtype is not None:
        if x.dtype != compute_dtype:
            x = x.astype(compute_dtype)
        if wt.dtype != compute_dtype:
            wt = wt.astype(compute_dtype)
    if out_dtype is None:
        out_dtype = x.dtype
    b = b.astype(jnp.float32).reshape(1, H_out)

    # M tiling: prefer no-pad choices (full extent or a divisor).
    if M <= 512 and M % 8 == 0:
        tm = M
    else:
        tm = None
        for c in (512, 256, 128, 64, 32, 16, 8):
            if M % c == 0:
                tm = c
                break
        if tm is None:
            tm = 256 if M >= 256 else _round_up(M, 8)
    M_pad = _round_up(M, tm)
    if M_pad != M:
        x = jnp.pad(x, ((0, M_pad - M), (0, 0)))

    tn = _pick_tile(H_out, (512, 256, 128))
    tk = _pick_tile(H_in, (512, 256, 128))
    grid = (M_pad // tm, H_out // tn, H_in // tk)

    out = pl.pallas_call(
        _linear_kernel,
        out_shape=jax.ShapeDtypeStruct((M_pad, H_out), out_dtype),
        grid=grid,
        in_specs=[
            pl.BlockSpec((tm, tk), lambda i, j, k: (i, k)),
            pl.BlockSpec((tk, tn), lambda i, j, k: (k, j)),
            pl.BlockSpec((1, tn), lambda i, j, k: (0, j)),
        ],
        out_specs=pl.BlockSpec((tm, tn), lambda i, j, k: (i, j)),
        scratch_shapes=[pltpu.VMEM((tm, tn), jnp.float32)],
        compiler_params=pltpu.CompilerParams(
            dimension_semantics=("parallel", "parallel", "arbitrary")),
    )(x, wt, b)
    return out[:M] if M_pad != M else out


# ----------------------------------------------------------------------------
# Kernel 2: attention for one (batch, query-tile) over ALL heads per step
# ----------------------------------------------------------------------------
def _mha_attn_kernel(*refs, n_heads, head_dim, has_bias):
    if has_bias:
        q_ref, k_ref, v_ref, bias_ref, ctx_ref, attn_ref, ctx_acc = refs
    else:
        q_ref, k_ref, v_ref, ctx_ref, attn_ref, ctx_acc = refs
        bias_ref = None

    for h in range(n_heads):               # static unroll, ref-sliced per head
        lo = h * head_dim
        hi = lo + head_dim
        qh = q_ref[0, :, lo:hi]             # (tq, hd) -- 1/sqrt(hd) pre-folded
        kh = k_ref[0, :, lo:hi]             # (Sk, hd)

        # energy = qh @ kh^T  (contract last dims; no explicit transpose)
        energy = jax.lax.dot_general(
            qh, kh, (((1,), (1,)), ((), ())),
            preferred_element_type=jnp.float32)            # (tq, Sk)
        if has_bias:
            energy = energy + bias_ref[0].astype(jnp.float32)

        # numerically-stable softmax; exact reciprocal so rows sum to 1
        e_max = jnp.max(energy, axis=-1, keepdims=True)
        e_exp = jnp.exp(energy - e_max)
        denom = jnp.sum(e_exp, axis=-1, keepdims=True)
        attn = e_exp * pl.reciprocal(denom)                 # (tq, Sk)

        attn_ref[0, h] = attn.astype(attn_ref.dtype)

        vh = v_ref[0, :, lo:hi]                             # (Sk, hd)
        ctx_acc[:, lo:hi] = jnp.dot(attn.astype(vh.dtype), vh,
                                    preferred_element_type=jnp.float32)

    # single lane-dense (tq, H) store of the merged heads
    ctx_ref[0] = ctx_acc[...].astype(ctx_ref.dtype)


def attention_heads(q, k, v, bias, n_heads, *, attn_dtype=jnp.bfloat16):
    """q: (B, Sq, H), k/v: (B, Sk, H), bias: (B, Sq, Sk) additive bf16 or None.

    Returns ctx (B, Sq, H) [q.dtype] and attn (B, n_heads, Sq, Sk) [attn_dtype]."""
    B, Sq, H = q.shape
    Sk = k.shape[1]
    head_dim = H // n_heads
    comp_sz = q.dtype.itemsize
    attn_sz = jnp.dtype(attn_dtype).itemsize
    bias_sz = bias.dtype.itemsize if bias is not None else 0

    # Per-step VMEM footprint (double-buffered blocks + scratch).
    def footprint(tq):
        return (2 * tq * H * comp_sz                   # q
                + 2 * tq * H * comp_sz                 # ctx
                + 2 * n_heads * tq * Sk * attn_sz      # attention map
                + 2 * tq * Sk * bias_sz                # mask bias
                + 4 * Sk * H * comp_sz                 # k + v
                + tq * H * 4)                          # ctx accumulator scratch

    budget = 44 << 20      # headroom under v7x's 64 MiB physical VMEM
    tq = None
    for c in (512, 256, 128, 64, 32, 16, 8):           # prefer divisors: no pad
        if c <= Sq and Sq % c == 0 and footprint(c) <= budget:
            tq = c
            break
    if tq is None:
        tq = Sq if (Sq <= 512 and footprint(Sq) <= budget) else 8

    Sq_pad = _round_up(Sq, tq)
    if Sq_pad != Sq:
        q = jnp.pad(q, ((0, 0), (0, Sq_pad - Sq), (0, 0)))
        if bias is not None:
            bias = jnp.pad(bias, ((0, 0), (0, Sq_pad - Sq), (0, 0)))
    nq = Sq_pad // tq

    has_bias = bias is not None
    kern = functools.partial(_mha_attn_kernel, n_heads=n_heads,
                             head_dim=head_dim, has_bias=has_bias)

    in_specs = [
        pl.BlockSpec((1, tq, H), lambda b, i: (b, i, 0)),
        pl.BlockSpec((1, Sk, H), lambda b, i: (b, 0, 0)),
        pl.BlockSpec((1, Sk, H), lambda b, i: (b, 0, 0)),
    ]
    inputs = [q, k, v]
    if has_bias:
        in_specs.append(pl.BlockSpec((1, tq, Sk), lambda b, i: (b, i, 0)))
        inputs.append(bias)

    vmem_limit = int(min(64 << 20, max(32 << 20, footprint(tq) + (8 << 20))))

    ctx, attn = pl.pallas_call(
        kern,
        out_shape=(
            jax.ShapeDtypeStruct((B, Sq_pad, H), q.dtype),
            jax.ShapeDtypeStruct((B, n_heads, Sq_pad, Sk), attn_dtype),
        ),
        grid=(B, nq),
        in_specs=in_specs,
        out_specs=(
            pl.BlockSpec((1, tq, H), lambda b, i: (b, i, 0)),
            pl.BlockSpec((1, n_heads, tq, Sk), lambda b, i: (b, 0, i, 0)),
        ),
        scratch_shapes=[pltpu.VMEM((tq, H), jnp.float32)],
        compiler_params=pltpu.CompilerParams(
            dimension_semantics=("parallel", "parallel"),
            vmem_limit_bytes=vmem_limit),
    )(*inputs)

    if Sq_pad != Sq:
        ctx = ctx[:, :Sq]
        attn = attn[:, :, :Sq]
    return ctx, attn


# ----------------------------------------------------------------------------
# Module wrapper (mirrors MultiHeadAttentionLayer.forward)
# ----------------------------------------------------------------------------
def init_mha_params(key, hidden_dim):
    ks = jax.random.split(key, 8)
    bound = 1.0 / math.sqrt(hidden_dim)   # nn.Linear default init range
    def lin(kw, kb):
        w = jax.random.uniform(kw, (hidden_dim, hidden_dim), jnp.float32,
                               -bound, bound)
        b = jax.random.uniform(kb, (hidden_dim,), jnp.float32, -bound, bound)
        return w, b
    return {
        "fc_q": lin(ks[0], ks[1]),
        "fc_k": lin(ks[2], ks[3]),
        "fc_v": lin(ks[4], ks[5]),
        "fc_o": lin(ks[6], ks[7]),
    }


def prepare_mha_weights(params, n_heads, compute_dtype=jnp.float32):
    """Transpose / fuse / scale / cast the weights ONCE (not every forward)."""
    wq, bq = params["fc_q"]
    wk, bk = params["fc_k"]
    wv, bv = params["fc_v"]
    wo, bo = params["fc_o"]
    H = wq.shape[0]
    head_dim = H // n_heads
    inv_scale = 1.0 / math.sqrt(float(head_dim))

    wq_t = (wq.T * inv_scale).astype(compute_dtype)    # fold 1/sqrt(hd) into Wq
    bq_s = (bq * inv_scale).astype(jnp.float32)
    wk_t = wk.T.astype(compute_dtype)
    wv_t = wv.T.astype(compute_dtype)
    return {
        "compute_dtype": compute_dtype,
        "n_heads": n_heads,
        "wq_t": wq_t, "bq": bq_s,
        "wk_t": wk_t, "bk": bk.astype(jnp.float32),
        "wv_t": wv_t, "bv": bv.astype(jnp.float32),
        "wqkv_t": jnp.concatenate([wq_t, wk_t, wv_t], axis=1),   # (H, 3H)
        "bqkv": jnp.concatenate([bq_s, bk, bv], axis=0).astype(jnp.float32),
        "wkv_t": jnp.concatenate([wk_t, wv_t], axis=1),          # (H, 2H)
        "bkv": jnp.concatenate([bk, bv], axis=0).astype(jnp.float32),
        "wo_t": wo.T.astype(compute_dtype),
        "bo": bo.astype(jnp.float32),
    }


def mha_forward(params, query, key, value, n_heads, mask=None,
                compute_dtype=jnp.float32, attn_dtype=jnp.bfloat16,
                prepared=None, self_attention=None):
    """query/key/value: (B, S, H).  Returns (x: (B,Sq,H) f32,
    attention: (B,nH,Sq,Sk) [attn_dtype])."""
    if prepared is None:
        prepared = prepare_mha_weights(params, n_heads, compute_dtype)
    compute_dtype = prepared["compute_dtype"]

    B, Sq, H = query.shape
    Sk = key.shape[1]
    assert H % n_heads == 0 and value.shape[1] == Sk

    if self_attention is None:           # object-identity check; pass True under
        self_attention = (query is key) and (key is value)   # jit to force fusion
    kv_shared = self_attention or (key is value)

    # --- Q/K/V projections (fused where the inputs coincide) ---------------
    if self_attention:
        qkv = linear(query.reshape(B * Sq, H), prepared["wqkv_t"],
                     prepared["bqkv"], compute_dtype=compute_dtype,
                     out_dtype=compute_dtype)
        Q, K, V = jnp.split(qkv, 3, axis=1)
    else:
        Q = linear(query.reshape(B * Sq, H), prepared["wq_t"], prepared["bq"],
                   compute_dtype=compute_dtype, out_dtype=compute_dtype)
        if kv_shared:
            kv = linear(key.reshape(B * Sk, H), prepared["wkv_t"],
                        prepared["bkv"], compute_dtype=compute_dtype,
                        out_dtype=compute_dtype)
            K, V = jnp.split(kv, 2, axis=1)
        else:
            K = linear(key.reshape(B * Sk, H), prepared["wk_t"], prepared["bk"],
                       compute_dtype=compute_dtype, out_dtype=compute_dtype)
            V = linear(value.reshape(B * Sk, H), prepared["wv_t"],
                       prepared["bv"], compute_dtype=compute_dtype,
                       out_dtype=compute_dtype)

    Q = Q.reshape(B, Sq, H)
    K = K.reshape(B, Sk, H)
    V = V.reshape(B, Sk, H)

    # --- additive mask bias (bf16): 0 where attended, -1e10 where masked ---
    if mask is None:
        bias = None                       # no-mask path: skip bias DMA and add
    else:
        m = jnp.broadcast_to(mask, (B, 1, Sq, Sk)).reshape(B, Sq, Sk)
        bias = jnp.where(m == 0, jnp.float32(-1e10),
                         jnp.float32(0.0)).astype(jnp.bfloat16)

    # --- attention over all heads, lane-dense (B, Sq, H) context -----------
    ctx, attn = attention_heads(Q, K, V, bias, n_heads, attn_dtype=attn_dtype)

    # --- output projection --------------------------------------------------
    x = linear(ctx.reshape(B * Sq, H), prepared["wo_t"], prepared["bo"],
               compute_dtype=compute_dtype,
               out_dtype=jnp.float32).reshape(B, Sq, H)
    return x, attn


# ----------------------------------------------------------------------------
# Pure-JAX reference (mirrors the PyTorch forward) for verification
# ----------------------------------------------------------------------------
def mha_reference(params, query, key, value, n_heads, mask=None):
    B, Sq, H = query.shape
    Sk = key.shape[1]
    hd = H // n_heads
    lin = lambda x, w, b: x @ w.T + b
    Q = lin(query, *params["fc_q"]).reshape(B, Sq, n_heads, hd).transpose(0, 2, 1, 3)
    K = lin(key, *params["fc_k"]).reshape(B, Sk, n_heads, hd).transpose(0, 2, 1, 3)
    V = lin(value, *params["fc_v"]).reshape(B, Sk, n_heads, hd).transpose(0, 2, 1, 3)
    energy = jnp.einsum("bhqd,bhkd->bhqk", Q, K) / math.sqrt(hd)
    if mask is not None:
        energy = jnp.where(mask == 0, -1e10, energy)
    attn = jax.nn.softmax(energy, axis=-1)
    x = jnp.einsum("bhqk,bhkd->bhqd", attn, V)
    x = x.transpose(0, 2, 1, 3).reshape(B, Sq, H)
    return lin(x, *params["fc_o"]), attn


if __name__ == "__main__":
    B, S, H, N_HEADS = 2, 8, 32, 4

    root = jax.random.PRNGKey(0)
    k_x, k_q, k_kv, k_par = jax.random.split(root, 4)
    params = init_mha_params(k_par, H)
    prepared_f32 = prepare_mha_weights(params, N_HEADS, jnp.float32)

    # ---- case 1: self-attention with causal mask (fused QKV path) ----------
    x_in = jax.random.normal(k_x, (B, S, H), jnp.float32)
    causal = jnp.tril(jnp.ones((S, S), jnp.float32))[None, None]
    causal = jnp.broadcast_to(causal, (B, 1, S, S))

    out, attn = mha_forward(params, x_in, x_in, x_in, N_HEADS, mask=causal,
                            prepared=prepared_f32)
    jax.block_until_ready((out, attn))
    out_r, attn_r = mha_reference(params, x_in, x_in, x_in, N_HEADS, mask=causal)

    assert out.shape == (B, S, H)
    assert attn.shape == (B, N_HEADS, S, S)
    assert jnp.allclose(jnp.sum(attn.astype(jnp.float32), axis=-1), 1.0, atol=2e-2)
    assert jnp.allclose(out, out_r, atol=2e-2, rtol=2e-2)
    assert jnp.allclose(attn.astype(jnp.float32), attn_r, atol=2e-2, rtol=2e-2)

    # ---- case 2: cross-attention, no mask, Sq != Sk (fused KV path) --------
    S_KV = 16
    q_in = jax.random.normal(k_q, (B, S, H), jnp.float32)
    kv_in = jax.random.normal(k_kv, (B, S_KV, H), jnp.float32)

    out2, attn2 = mha_forward(params, q_in, kv_in, kv_in, N_HEADS, mask=None,
                              prepared=prepared_f32)
    jax.block_until_ready((out2, attn2))
    out2_r, attn2_r = mha_reference(params, q_in, kv_in, kv_in, N_HEADS, mask=None)

    assert out2.shape == (B, S, H)
    assert attn2.shape == (B, N_HEADS, S, S_KV)
    assert jnp.allclose(out2, out2_r, atol=2e-2, rtol=2e-2)
    assert jnp.allclose(attn2.astype(jnp.float32), attn2_r, atol=2e-2, rtol=2e-2)

    # ---- case 3: bf16 compute path (v6e/v7x MXU recipe), loose tolerance ----
    prepared_bf16 = prepare_mha_weights(params, N_HEADS, jnp.bfloat16)
    out3, attn3 = mha_forward(params, x_in, x_in, x_in, N_HEADS, mask=causal,
                              prepared=prepared_bf16)
    jax.block_until_ready((out3, attn3))
    assert out3.shape == (B, S, H) and attn3.shape == (B, N_HEADS, S, S)
    assert jnp.allclose(out3, out_r, atol=1e-1, rtol=1e-1)

    print("KERNEL_OK")
</pallas_src>

<mosaic_0001>
module attributes {stable_mosaic.version = 11 : i64} {
  func.func @_linear_kernel(%arg0: i32, %arg1: i32, %arg2: i32, %arg3: memref<16x32xf32, #tpu.memory_space<vmem>>, %arg4: memref<32x96xf32, #tpu.memory_space<vmem>>, %arg5: memref<1x96xf32, #tpu.memory_space<vmem>>, %arg6: memref<16x96xf32, #tpu.memory_space<vmem>>, %arg7: memref<16x96xf32, #tpu.memory_space<vmem>>) attributes {dimension_semantics = [#tpu.dimension_semantics<parallel>, #tpu.dimension_semantics<parallel>, #tpu.dimension_semantics<arbitrary>], iteration_bounds = array<i64: 1, 1, 1>, scalar_prefetch = 0 : i64, scratch_operands = 1 : i64, tpu.core_type = #tpu.core_type<tc>, window_params = [{transform_indices = @transform_0, window_bounds = array<i64: 16, 32>}, {transform_indices = @transform_1, window_bounds = array<i64: 32, 96>}, {transform_indices = @transform_2, window_bounds = array<i64: 1, 96>}, {transform_indices = @transform_3, window_bounds = array<i64: 16, 96>}]} {
    %c0_i32 = arith.constant 0 : i32
    %0 = arith.cmpi eq, %arg2, %c0_i32 : i32
    %1 = arith.extui %0 : i1 to i32
    %c0_i32_0 = arith.constant 0 : i32
    %2 = arith.cmpi ne, %1, %c0_i32_0 : i32
    scf.if %2 {
      %cst_10 = arith.constant 0.000000e+00 : f32
      %12 = vector.broadcast %cst_10 : f32 to vector<16x96xf32>
      %c0_11 = arith.constant 0 : index
      %c0_12 = arith.constant 0 : index
      %13 = vector.load %arg7[%c0_11, %c0_12] : memref<16x96xf32, #tpu.memory_space<vmem>>, vector<16x96xf32>
      tpu.vector_store %arg7[%c0_11, %c0_12], %12 {strides = array<i32>} : memref<16x96xf32, #tpu.memory_space<vmem>>, vector<16x96xf32>,
    } else {
    }
    %c0 = arith.constant 0 : index
    %c0_1 = arith.constant 0 : index
    %3 = vector.load %arg7[%c0, %c0_1] : memref<16x96xf32, #tpu.memory_space<vmem>>, vector<16x96xf32>
    %c0_2 = arith.constant 0 : index
    %c0_3 = arith.constant 0 : index
    %4 = vector.load %arg3[%c0_2, %c0_3] : memref<16x32xf32, #tpu.memory_space<vmem>>, vector<16x32xf32>
    %c0_4 = arith.constant 0 : index
    %c0_5 = arith.constant 0 : index
    %5 = vector.load %arg4[%c0_4, %c0_5] : memref<32x96xf32, #tpu.memory_space<vmem>>, vector<32x96xf32>
    %cst = arith.constant dense<0.000000e+00> : vector<16x96xf32>
    %6 = tpu.matmul %4, %5, %cst {dimension_numbers = #tpu.dot_dimension_numbers<[1], [0], [0], [1], [0, 0, 1, 1], [], []>} : vector<16x32xf32>, vector<32x96xf32>, vector<16x96xf32> -> vector<16x96xf32>
    %7 = arith.addf %3, %6 : vector<16x96xf32>
    %c0_6 = arith.constant 0 : index
    %c0_7 = arith.constant 0 : index
    %8 = vector.load %arg7[%c0_6, %c0_7] : memref<16x96xf32, #tpu.memory_space<vmem>>, vector<16x96xf32>
    tpu.vector_store %arg7[%c0_6, %c0_7], %7 {strides = array<i32>} : memref<16x96xf32, #tpu.memory_space<vmem>>, vector<16x96xf32>,
    %c0_i32_8 = arith.constant 0 : i32
    %9 = arith.cmpi eq, %arg2, %c0_i32_8 : i32
    %10 = arith.extui %9 : i1 to i32
    %c0_i32_9 = arith.constant 0 : i32
    %11 = arith.cmpi ne, %10, %c0_i32_9 : i32
    scf.if %11 {
      %c0_10 = arith.constant 0 : index
      %c0_11 = arith.constant 0 : index
      %12 = vector.load %arg7[%c0_10, %c0_11] : memref<16x96xf32, #tpu.memory_space<vmem>>, vector<16x96xf32>
      %c0_12 = arith.constant 0 : index
      %c0_13 = arith.constant 0 : index
      %13 = vector.load %arg5[%c0_12, %c0_13] : memref<1x96xf32, #tpu.memory_space<vmem>>, vector<1x96xf32>
      %14 = vector.broadcast %13 : vector<1x96xf32> to vector<16x96xf32>
      %15 = arith.addf %12, %14 : vector<16x96xf32>
      %c0_14 = arith.constant 0 : index
      %c0_15 = arith.constant 0 : index
      %16 = vector.load %arg6[%c0_14, %c0_15] : memref<16x96xf32, #tpu.memory_space<vmem>>, vector<16x96xf32>
      tpu.vector_store %arg6[%c0_14, %c0_15], %15 {strides = array<i32>} : memref<16x96xf32, #tpu.memory_space<vmem>>, vector<16x96xf32>,
    } else {
    }
    return
  }
  func.func @transform_0(%arg0: i32, %arg1: i32, %arg2: i32) -> (i32, i32) {
    %c0_i32 = arith.constant 0 : i32
    return %arg0, %arg2 : i32, i32
  }
  func.func @transform_1(%arg0: i32, %arg1: i32, %arg2: i32) -> (i32, i32) {
    %c0_i32 = arith.constant 0 : i32
    return %arg2, %arg1 : i32, i32
  }
  func.func @transform_2(%arg0: i32, %arg1: i32, %arg2: i32) -> (i32, i32) {
    %c0_i32 = arith.constant 0 : i32
    %c0_i32_0 = arith.constant 0 : i32
    return %c0_i32, %arg1 : i32, i32
  }
  func.func @transform_3(%arg0: i32, %arg1: i32, %arg2: i32) -> (i32, i32) {
    %c0_i32 = arith.constant 0 : i32
    return %arg0, %arg1 : i32, i32
  }
}

</mosaic_0001>

<llo_original>
// kernel: tpu_custom_call.1
$region0: #{tpu_custom_call.1}
  #allocation0 [shape = 'u32[]', space=smem, size = 0x4, offset = 0x4, fixed_abs, tag = 'smem constant byte address 0x4 - core index']
  #allocation1 [shape = 'u32[144,128]{1,0:T(1,128)}', space=vmem, size = 0x12000, scoped, tag = 'internal scratch']
  #allocation2 [shape = 'f32[16,96]{1,0:T(8,128)}', space=vmem, size = 0x2000, scoped, tag = 'scratch operand']
  %s0 = inlined_call_operand.hbm [shape: f32[16,32], index: 0, kind: input, shape index: {}]
  %s1 = inlined_call_operand.hbm [shape: f32[32,96], index: 1, kind: input, shape index: {}]
  %s2 = inlined_call_operand.vmem [shape: f32[1,96], index: 2, kind: input, shape index: {}]
  %s3 = inlined_call_operand.hbm [shape: f32[16,96], index: 3, kind: output, shape index: {}]
  %s4 = sld [smem:[#allocation0]]
  $region38: #{tpu_custom_call.1} parent=0
    _
  %s6 = ssub.s32 1, %s4
  %s7 = scalar_select 0, %s6, %s4
  $region1: #{tpu_custom_call.1} parent=0
    #allocation3 [shape = 'u8[8192]{0}', space=vmem, size = 0x2000, scoped, tag = 'input window, operand 0, single buffered']
    #allocation4 [shape = 's32[1]{0}', space=sflag, size = 0x4, scoped, tag = 'scoped memory for tpu_custom_call.1']
    #allocation5 [shape = 's32[1]{0}', space=sflag, size = 0x4, scoped, tag = 'scoped memory for tpu_custom_call.1']
    #allocation6 [shape = 'u8[16384]{0}', space=vmem, size = 0x4000, scoped, tag = 'input window, operand 1, single buffered']
    #allocation7 [shape = 's32[1]{0}', space=sflag, size = 0x4, scoped, tag = 'scoped memory for tpu_custom_call.1']
    #allocation8 [shape = 'u8[8192]{0}', space=vmem, size = 0x2000, scoped, tag = 'output window, operand 0, single buffered']
    %8 = vsyncpa [#allocation4], 0
    %9 = vsyncpa [#allocation7], 0
    %10 = vsyncpa [#allocation5], 0
    // Predicated region
    $region2: #{tpu_custom_call.1} parent=1 // pred_check
      _
    $region3: #{tpu_custom_call.1} parent=1 // pred_check_branch
      %12 = sbr.rel (0) target = $region5
    $region4: #{tpu_custom_call.1} parent=1 // pred_region
      %s14 = ssub.s32 256, 256
      %15 = vsyncadd [#allocation4], %s14
      %s16 = sshll.u32 [#allocation3], 4
      %s17 = int_to_ptr.vmem [resolvable:$true] %s16
      %22 = dma.hbm_to_vmem [thread:$0]  %s0, 256, %s17, [#allocation4], 128, 128, 8
    $region5: #{tpu_custom_call.1} parent=1 // pred_fallthru
      _
    // Predicated region
    $region6: #{tpu_custom_call.1} parent=1 // pred_check
      _
    $region7: #{tpu_custom_call.1} parent=1 // pred_check_branch
      %24 = sbr.rel (0) target = $region9
    $region8: #{tpu_custom_call.1} parent=1 // pred_region
      %s26 = ssub.s32 512, 512
      %27 = vsyncadd [#allocation7], %s26
      %s28 = sshll.u32 [#allocation6], 4
      %s29 = int_to_ptr.vmem [resolvable:$true] %s28
      %34 = dma.hbm_to_vmem [thread:$0]  %s1, 512, %s29, [#allocation7], 128, 128, 8
    $region9: #{tpu_custom_call.1} parent=1 // pred_fallthru
      _
    // Predicated region
    $region10: #{tpu_custom_call.1} parent=1 // pred_check
      _
    $region11: #{tpu_custom_call.1} parent=1 // pred_check_branch
      %36 = sbr.rel (0) target = $region13
    $region12: #{tpu_custom_call.1} parent=1 // pred_region
      _
    $region13: #{tpu_custom_call.1} parent=1 // pred_fallthru
      _
    // Predicated region
    $region14: #{tpu_custom_call.1} parent=1 // pred_check
      _
    $region15: #{tpu_custom_call.1} parent=1 // pred_check_branch
      %38 = sbr.rel (0) target = $region17
    $region16: #{tpu_custom_call.1} parent=1 // pred_region
      %39 = dma.done [#allocation4], 256
    $region17: #{tpu_custom_call.1} parent=1 // pred_fallthru
      _
    // Predicated region
    $region18: #{tpu_custom_call.1} parent=1 // pred_check
      _
    $region19: #{tpu_custom_call.1} parent=1 // pred_check_branch
      %41 = sbr.rel (0) target = $region21
    $region20: #{tpu_custom_call.1} parent=1 // pred_region
      %42 = dma.done [#allocation7], 512
    $region21: #{tpu_custom_call.1} parent=1 // pred_fallthru
      _
    %p43 = scmp.eq.s32.totalorder 0, 0
    // Predicated region
    $region22: #{tpu_custom_call.1} parent=1 // pred_check
      %p44 = pneg %p43
    $region23: #{tpu_custom_call.1} parent=1 // pred_check_branch
      %46 = sbr.rel (%p44) target = $region25
    $region24: #{tpu_custom_call.1} parent=1 // pred_region
      %vm47 = vcmask 785408
      %48 = vst.msk [vmem:[#allocation2] sm:$0xff] %vm47, 0.0
      %49 = vst.msk [vmem:[#allocation2 + $0x8] sm:$0xff] %vm47, 0.0
    $region25: #{tpu_custom_call.1} parent=1 // pred_fallthru
      _
    %v50 = vld [vmem:[#allocation2] sm:$0xff]
    %v51 = vld [vmem:[#allocation2 + $0x8] sm:$0xff]
    %v52 = vld [vmem:[#allocation3] sm:$0xff]
    %v53 = vld [vmem:[#allocation3 + $0x8] sm:$0xff]
    %v54 = vld [vmem:[#allocation6] sm:$0xff]
    %v55 = vld [vmem:[#allocation6 + $0x8] sm:$0xff]
    %v56 = vld [vmem:[#allocation6 + $0x10] sm:$0xff]
    %v57 = vld [vmem:[#allocation6 + $0x18] sm:$0xff]
    %vm58 = vcmask 261120
    %v60 = vsel %vm58, %v52, 0
    %v63 = vsel %vm58, %v53, 0
    %65 = vmatprep.subr.mxu0 0.0
    %66 = vmatpush1.msra.mxu0 0.0
    %67 = vmatprep.subr.mxu0 0.0
    %68 = vmatpush1.msra.mxu0 0.0
    %69 = vmatprep.subr.mxu0 0.0
    %70 = vmatpush1.msra.mxu0 0.0
    %71 = vmatprep.subr.mxu0 0.0
    %72 = vmatpush1.msra.mxu0 0.0
    %73 = vmatprep.subr.mxu0 0.0
    %74 = vmatpush1.msra.mxu0 0.0
    %75 = vmatprep.subr.mxu0 0.0
    %76 = vmatpush1.msra.mxu0 0.0
    %77 = vmatprep.subr.mxu0 0.0
    %78 = vmatpush1.msra.mxu0 0.0
    %79 = vmatprep.subr.mxu0 0.0
    %80 = vmatpush1.msra.mxu0 0.0
    %81 = vmatprep.subr.mxu0 0.0
    %82 = vmatpush1.msra.mxu0 0.0
    %83 = vmatprep.subr.mxu0 0.0
    %84 = vmatpush1.msra.mxu0 0.0
    %85 = vmatprep.subr.mxu0 0.0
    %86 = vmatpush1.msra.mxu0 0.0
    %87 = vmatprep.subr.mxu0 0.0
    %88 = vmatpush1.msra.mxu0 0.0
    %89 = vmatprep.subr.mxu0 0.0
    %90 = vmatpush1.msra.mxu0 %v57
    %91 = vmatprep.subr.mxu0 0.0
    %92 = vmatpush1.msra.mxu0 %v56
    %93 = vmatprep.subr.mxu0 0.0
    %94 = vmatpush1.msra.mxu0 %v55
    %95 = vmatprep.subr.mxu0 0.0
    %96 = vmatpush1.msra.mxu0 %v54
    %97 = vmatprep.subr.mxu0 0.0
    %98 = vmatpush2.msra.mxu0 0.0
    %99 = vmatprep.subr.mxu0 0.0
    %100 = vmatpush2.msra.mxu0 0.0
    %101 = vmatprep.subr.mxu0 0.0
    %102 = vmatpush2.msra.mxu0 0.0
    %103 = vmatprep.subr.mxu0 0.0
    %104 = vmatpush2.msra.mxu0 0.0
    %105 = vmatprep.subr.mxu0 0.0
    %106 = vmatpush2.msra.mxu0 0.0
    %107 = vmatprep.subr.mxu0 0.0
    %108 = vmatpush2.msra.mxu0 0.0
    %109 = vmatprep.subr.mxu0 0.0
    %110 = vmatpush2.msra.mxu0 0.0
    %111 = vmatprep.subr.mxu0 0.0
    %112 = vmatpush2.msra.mxu0 0.0
    %113 = vmatprep.subr.mxu0 0.0
    %114 = vmatpush2.msra.mxu0 0.0
    %115 = vmatprep.subr.mxu0 0.0
    %116 = vmatpush2.msra.mxu0 0.0
    %117 = vmatprep.subr.mxu0 0.0
    %118 = vmatpush2.msra.mxu0 0.0
    %119 = vmatprep.subr.mxu0 0.0
    %120 = vmatpush2.msra.mxu0 0.0
    %121 = vmatprep.subr.mxu0 0.0
    %122 = vmatpush2.msra.mxu0 0.0
    %123 = vmatprep.subr.mxu0 0.0
    %124 = vmatpush2.msra.mxu0 0.0
    %125 = vmatprep.subr.mxu0 0.0
    %126 = vmatpush2.msra.mxu0 0.0
    %127 = vmatprep.subr.mxu0 0.0
    %128 = vmatpush2.msra.mxu0 0.0
    %129 = vmatprep.mubr.f32.mxu0 0.0
    %130 = vmatmul.mubr.f32.gmra.mxu0 %v60
    %v131 = vpop.f32.mrf.mxu0
    %v132 = vadd.f32 0.0, %v131
    %v133 = vpop.f32.mrf.mxu0
    %134 = vmatprep.mubr.f32.mxu0 0.0
    %135 = vmatmul.mubr.f32.gmra.mxu0 %v63
    %v136 = vpop.f32.mrf.mxu0
    %v137 = vadd.f32 0.0, %v136
    %v138 = vpop.f32.mrf.mxu0
    %139 = vdwg.mxu0
    %v140 = vadd.f32 %v50, %v132
    %v141 = vadd.f32 %v51, %v137
    %vm142 = vcmask 785408
    %143 = vst.msk [vmem:[#allocation2] sm:$0xff] %vm142, %v140
    %144 = vst.msk [vmem:[#allocation2 + $0x8] sm:$0xff] %vm142, %v141
    // Predicated region
    $region26: #{tpu_custom_call.1} parent=1 // pred_check
      %p145 = pneg %p43
    $region27: #{tpu_custom_call.1} parent=1 // pred_check_branch
      %147 = sbr.rel (%p145) target = $region29
    $region28: #{tpu_custom_call.1} parent=1 // pred_region
      %v148 = vld [vmem:[#allocation2] sm:$0xff]
      %v149 = vld [vmem:[#allocation2 + $0x8] sm:$0xff]
      %v150 = vld [vmem:[%s2] sm:$0x1]
      %v152 = vlaneseq
      %v153 = vshrl.u32 %v152, 7
      %v154 = vsub.s32 0, %v153
      %v155 = vrot.slane %v150, %v154
      %v157 = vadd.f32 %v148, %v155
      %v158 = vadd.f32 %v149, %v155
      %159 = vst.msk [vmem:[#allocation8] sm:$0xff] %vm142, %v157
      %160 = vst.msk [vmem:[#allocation8 + $0x8] sm:$0xff] %vm142, %v158
    $region29: #{tpu_custom_call.1} parent=1 // pred_fallthru
      _
    // Predicated region
    $region30: #{tpu_custom_call.1} parent=1 // pred_check
      _
    $region31: #{tpu_custom_call.1} parent=1 // pred_check_branch
      %162 = sbr.rel (0) target = $region33
    $region32: #{tpu_custom_call.1} parent=1 // pred_region
      %s164 = ssub.s32 256, 256
      %165 = vsyncadd [#allocation5], %s164
      %s166 = sshll.u32 [#allocation8], 4
      %s167 = int_to_ptr.vmem [resolvable:$true] %s166
      %172 = dma.vmem_to_hbm [thread:$0]  %s167, 256, %s3, [#allocation5], 128, 128, 8
    $region33: #{tpu_custom_call.1} parent=1 // pred_fallthru
      _
    // Predicated region
    $region34: #{tpu_custom_call.1} parent=1 // pred_check
      _
    $region35: #{tpu_custom_call.1} parent=1 // pred_check_branch
      %174 = sbr.rel (0) target = $region37
    $region36: #{tpu_custom_call.1} parent=1 // pred_region
      %175 = dma.done [#allocation5], 256
    $region37: #{tpu_custom_call.1} parent=1 // pred_fallthru
      _
    %176 = vsyncpa [#allocation4], 1
    %177 = vsyncpa [#allocation7], 1
    %178 = vsyncpa [#allocation5], 1

</llo_original>
